<compile_context>
chip_gen: v7x
topology: tpu7x:2x2x1
jax: 0.10.0
libtpu: 0.0.40
codegen_flags: <defaults>
</compile_context>

<pallas_src>
import jax
import jax.numpy as jnp
from jax import lax
from jax.experimental import pallas as pl
from jax.experimental.pallas import tpu as pltpu

LANE = 128     # TPU lane width
KS = 3         # conv kernel size over (H, W); the depth tap of the (3,3,1) conv is 1


def _round_up(x, m):
    return (x + m - 1) // m * m


# ----------------------------------------------------------------------------
# pltpu.roll rotation-direction probe (cheap one-off insurance).
# pltpu.roll is expected to follow jnp.roll semantics (out[i] = x[i - shift]); a tiny
# 8x128 probe pins the direction on the actual backend so conv2's tap offsets can never
# be silently mirrored.
# ----------------------------------------------------------------------------
_ROLL_MATCHES_JNP = True


def _probe_roll_convention():
    global _ROLL_MATCHES_JNP
    x = jnp.arange(8 * 128, dtype=jnp.float32).reshape(8, 128)

    def probe_kernel(x_ref, o_ref):
        o_ref[...] = pltpu.roll(x_ref[...], 1, 0)

    y = pl.pallas_call(
        probe_kernel, out_shape=jax.ShapeDtypeStruct((8, 128), jnp.float32))(x)
    if bool(jnp.allclose(y, jnp.roll(x, 1, axis=0))):
        _ROLL_MATCHES_JNP = True
    elif bool(jnp.allclose(y, jnp.roll(x, -1, axis=0))):
        _ROLL_MATCHES_JNP = False
    else:
        raise RuntimeError("unexpected pltpu.roll behaviour on this backend")


def _row_shift(t, off, n):
    """out[p] = t[(p + off) % n] along the (sublane) pixel axis 0."""
    if off == 0:
        return t
    shift = (-off) % n if _ROLL_MATCHES_JNP else off % n
    return pltpu.roll(t, shift, 0)


# ----------------------------------------------------------------------------
# Fused UnetConv3 Pallas kernel:
#   conv1 (single im2col matmul, BN1 folded)  -> ReLU ->
#   conv2 (9 per-tap matmuls + roll offset-adds) -> +shift2 -> ReLU
# ----------------------------------------------------------------------------
def _make_fused_conv_kernel(wp):
    def kernel(x_ref, w1_ref, w2_ref, shift2_ref, o_ref):
        # x_ref:      (1, Lp, 128) bf16  row-masked im2col of the gated concat (+ bias lane)
        # w1_ref:     (128, 128)   bf16  conv1 weight, BN1 scale folded, row 9*C = shift1
        # w2_ref:     (9, 128, 128) bf16 conv2 per-tap weights, BN2 scale folded
        # shift2_ref: (1, 128)     f32   BN2 shift (+ conv2 bias)
        # o_ref:      (1, Lp, 128) bf16  conv2 output in the padded (Hp*Wp) pixel layout
        x = x_ref[0]
        n = x.shape[0]                       # Lp (multiple of 8)

        # conv1 + BN1 + ReLU: one lane-dense MXU matmul (K = 9*C + 1 real lanes).
        # Border / padding rows of the im2col are all-zero (incl. the bias lane), so they
        # come out as exact zeros -- which is exactly conv2's zero padding.
        y1 = jnp.dot(x, w1_ref[...], preferred_element_type=jnp.float32)
        y1 = jnp.maximum(y1, 0.0).astype(jnp.bfloat16)

        # conv2: per-tap matmul; the spatial offset is a sublane rotation of the result
        # (XLU), not a slice/copy.  Interior pixels never wrap because the pixel axis is
        # the zero-padded (Hp, Wp) grid flattened row-major.
        acc = jnp.zeros((n, LANE), jnp.float32)
        for ky in range(KS):
            for kx in range(KS):
                t = jnp.dot(y1, w2_ref[KS * ky + kx],
                            preferred_element_type=jnp.float32)
                acc = acc + _row_shift(t, (ky - 1) * wp + (kx - 1), n)

        o_ref[0] = jnp.maximum(acc + shift2_ref[...], 0.0).astype(o_ref.dtype)

    return kernel


def _fused_unetconv3(col, w1, w2, shift2, *, wp, vmem_limit_bytes=32 * 1024 * 1024):
    """col: (NB, Lp, 128) bf16 im2col input.  Returns (NB, Lp, 128) bf16 conv2 output."""
    NB, Lp, lane = col.shape
    return pl.pallas_call(
        _make_fused_conv_kernel(wp),
        out_shape=jax.ShapeDtypeStruct((NB, Lp, lane), jnp.bfloat16),
        grid=(NB,),
        in_specs=[
            pl.BlockSpec((1, Lp, lane), lambda b: (b, 0, 0)),
            pl.BlockSpec((lane, lane), lambda b: (0, 0)),
            pl.BlockSpec((KS * KS, lane, lane), lambda b: (0, 0, 0)),
            pl.BlockSpec((1, lane), lambda b: (0, 0)),
        ],
        out_specs=pl.BlockSpec((1, Lp, lane), lambda b: (b, 0, 0)),
        compiler_params=pltpu.CompilerParams(
            dimension_semantics=("parallel",),       # N*D slices are independent
            vmem_limit_bytes=vmem_limit_bytes,       # ~1.5 MiB/step actually used
        ),
    )(col, w1, w2, shift2)


# ----------------------------------------------------------------------------
# XLA glue: upsample + pad + concat + SqEx gate, then im2col packing
# ----------------------------------------------------------------------------
def _upsample_concat_sqex(inputs1, inputs2, sqex_w1, sqex_w2):
    """inputs1: (N, out_size, H, W, D) f32; inputs2: (N, in_size, H/2, W/2, D) f32.
    Returns gated concat in (N*D, H, W, C) layout, f32."""
    N, _, H, W, D = inputs1.shape
    c_low = inputs2.shape[1]

    # nn.Upsample(scale_factor=(2,2,1), mode='trilinear'), align_corners=False.
    up = jax.image.resize(inputs2, (N, c_low, H, W, D), method="trilinear")

    # F.pad(inputs1, 2 * [offset // 2, offset // 2, 0]); offset == 0 for exact 2x upsample.
    o2 = (up.shape[2] - inputs1.shape[2]) // 2
    outputs1 = jnp.pad(inputs1, ((0, 0), (0, 0), (o2, 0), (0, o2), (o2, o2)))

    concat = jnp.concatenate([outputs1, up], axis=1)          # (N, C, H, W, D)
    C = concat.shape[1]

    # SqEx: global average pool -> FC -> ReLU -> FC -> sigmoid -> channel gate.
    m = jnp.mean(concat, axis=(2, 3, 4))                      # (N, C)
    z = jnp.maximum(m @ sqex_w1.T, 0.0)
    gate = jax.nn.sigmoid(z @ sqex_w2.T)                      # (N, C)
    gated = concat * gate[:, :, None, None, None]

    # (N, C, H, W, D) -> (N*D, H, W, C): the (3,3,1) conv acts per depth slice.
    return jnp.transpose(gated, (0, 4, 2, 3, 1)).reshape(N * D, H, W, C)


def _build_im2col(x):
    """x: (NB, H, W, C) f32 gated input.  Returns bf16 (NB, Lp, 128) im2col over the
    zero-padded (H+2, W+2) pixel grid, plus (Hp, Wp, Lp).

    Lane layout per pixel: [tap0 ch0..C-1, ..., tap8 ch0..C-1, bias(=1 for interior), 0...].
    Non-interior rows (the conv2 zero-padding ring and the Lp alignment rows) are all-zero,
    so conv1 produces exact zeros there."""
    NB, H, W, C = x.shape
    assert KS * KS * C + 1 <= LANE, "im2col + bias lane must fit in 128 lanes"
    Hp, Wp = H + 2, W + 2

    x2 = jnp.pad(x, ((0, 0), (2, 2), (2, 2), (0, 0)))          # (NB, H+4, W+4, C)
    taps = [x2[:, ky:ky + Hp, kx:kx + Wp, :] for ky in range(KS) for kx in range(KS)]
    interior = jnp.pad(jnp.ones((NB, H, W, 1), x.dtype),
                       ((0, 0), (1, 1), (1, 1), (0, 0)))       # 1 inside, 0 on the ring
    col = jnp.concatenate(taps + [interior], axis=-1)          # (NB, Hp, Wp, 9C+1)
    col = col * interior                                       # zero the whole padding ring
    col = jnp.pad(col, ((0, 0), (0, 0), (0, 0), (0, LANE - col.shape[-1])))

    Lp = _round_up(Hp * Wp, 8)
    col = col.reshape(NB, Hp * Wp, LANE)
    col = jnp.pad(col, ((0, 0), (0, Lp - Hp * Wp), (0, 0)))
    return col.astype(jnp.bfloat16), (Hp, Wp, Lp)


# ----------------------------------------------------------------------------
# Parameter preparation (fold eval-mode BN into the bf16 conv weights)
# ----------------------------------------------------------------------------
def build_params(key, in_size, out_size, reduction=6, eps=1e-5):
    C = in_size + out_size
    assert C % reduction == 0, "n_features must be divisible by reduction"
    assert KS * KS * C + 1 <= LANE and out_size <= LANE
    hidden = C // reduction
    ks = jax.random.split(key, 12)
    f32 = jnp.float32

    # SqEx (two bias-free linear layers)
    sqex_w1 = 0.5 * jax.random.normal(ks[0], (hidden, C), f32)
    sqex_w2 = 0.5 * jax.random.normal(ks[1], (C, hidden), f32)
    # conv1: Conv3d(C -> out_size, k=(3,3,1), p=(1,1,0)) + BN + ReLU
    w1 = 0.1 * jax.random.normal(ks[2], (out_size, C, KS, KS, 1), f32)
    b1 = 0.1 * jax.random.normal(ks[3], (out_size,), f32)
    g1 = 1.0 + 0.1 * jax.random.normal(ks[4], (out_size,), f32)
    be1 = 0.1 * jax.random.normal(ks[5], (out_size,), f32)
    m1 = 0.1 * jax.random.normal(ks[6], (out_size,), f32)
    v1 = jnp.abs(1.0 + 0.1 * jax.random.normal(ks[7], (out_size,), f32))
    # conv2: Conv3d(out_size -> out_size, k=(3,3,1), p=(1,1,0)) + BN + ReLU
    w2 = 0.1 * jax.random.normal(ks[8], (out_size, out_size, KS, KS, 1), f32)
    b2 = 0.1 * jax.random.normal(ks[9], (out_size,), f32)
    g2 = 1.0 + 0.1 * jax.random.normal(ks[10], (out_size,), f32)
    be2 = 0.1 * jax.random.normal(ks[11], (out_size,), f32)
    m2 = jnp.zeros((out_size,), f32)
    v2 = jnp.ones((out_size,), f32)

    # Fold eval-mode BN: y = conv(x)*scale + shift, with the conv bias absorbed in shift.
    scale1 = g1 / jnp.sqrt(v1 + eps)
    shift1 = (b1 - m1) * scale1 + be1
    scale2 = g2 / jnp.sqrt(v2 + eps)
    shift2 = (b2 - m2) * scale2 + be2

    # HWIO weights with BN scale folded, rounded once to bf16 (the MXU operand dtype).
    w1_hwio = (jnp.transpose(w1[:, :, :, :, 0], (2, 3, 1, 0)) * scale1).astype(jnp.bfloat16)
    w2_hwio = (jnp.transpose(w2[:, :, :, :, 0], (2, 3, 1, 0)) * scale2).astype(jnp.bfloat16)
    shift1_bf = shift1.astype(jnp.bfloat16)

    # conv1 kernel operand: rows = im2col lanes (tap-major, then channel), row 9*C = shift1.
    w1_eff = jnp.zeros((LANE, LANE), f32)
    w1_eff = w1_eff.at[:KS * KS * C, :out_size].set(
        w1_hwio.astype(f32).reshape(KS * KS * C, out_size))
    w1_eff = w1_eff.at[KS * KS * C, :out_size].set(shift1_bf.astype(f32))
    w1_eff = w1_eff.astype(jnp.bfloat16)

    # conv2 kernel operand: (9, 128, 128), tap-major.
    w2_eff = jnp.zeros((KS * KS, LANE, LANE), f32)
    w2_eff = w2_eff.at[:, :out_size, :out_size].set(
        w2_hwio.astype(f32).reshape(KS * KS, out_size, out_size))
    w2_eff = w2_eff.astype(jnp.bfloat16)

    shift2_pad = jnp.pad(shift2, (0, LANE - out_size)).reshape(1, LANE).astype(f32)

    return {
        "sqex_w1": sqex_w1, "sqex_w2": sqex_w2,
        "w1_eff": w1_eff, "w2_eff": w2_eff, "shift2": shift2_pad,
        # reference-path copies (same bf16 quantization points as the kernel)
        "w1_hwio": w1_hwio, "shift1": shift1_bf.astype(f32),
        "w2_hwio": w2_hwio, "shift2_vec": shift2,
    }


# ----------------------------------------------------------------------------
# Module forward (fused XLA glue + the single fused Pallas conv kernel)
# ----------------------------------------------------------------------------
def unet_up3_sqex_forward(inputs1, inputs2, params):
    N, out_size, H, W, D = inputs1.shape
    gated = _upsample_concat_sqex(inputs1, inputs2, params["sqex_w1"], params["sqex_w2"])
    col, (Hp, Wp, Lp) = _build_im2col(gated)
    y2pad = _fused_unetconv3(col, params["w1_eff"], params["w2_eff"], params["shift2"],
                             wp=Wp)
    # (N*D, Lp, 128) bf16 padded-pixel layout -> (N, out_size, H, W, D) f32
    y = y2pad[:, :Hp * Wp, :out_size].reshape(N, D, Hp, Wp, out_size)
    y = y[:, :, 1:Hp - 1, 1:Wp - 1, :]
    return jnp.transpose(y, (0, 4, 2, 3, 1)).astype(jnp.float32)


# ----------------------------------------------------------------------------
# Pure-JAX reference (same bf16 quantization points, lax.conv for the convs)
# ----------------------------------------------------------------------------
def _conv_bn_relu_reference(x_bf16, w_hwio_bf16, shift):
    y = lax.conv_general_dilated(
        x_bf16.astype(jnp.float32), w_hwio_bf16.astype(jnp.float32),
        window_strides=(1, 1), padding=((1, 1), (1, 1)),
        dimension_numbers=("NHWC", "HWIO", "NHWC"),
        precision=lax.Precision.HIGHEST)
    return jnp.maximum(y + shift.reshape(1, 1, 1, -1), 0.0)


def unet_up3_sqex_reference(inputs1, inputs2, params):
    N, out_size, H, W, D = inputs1.shape
    gated = _upsample_concat_sqex(inputs1, inputs2, params["sqex_w1"], params["sqex_w2"])
    x = gated.astype(jnp.bfloat16)
    y1 = _conv_bn_relu_reference(x, params["w1_hwio"], params["shift1"])
    y2 = _conv_bn_relu_reference(y1.astype(jnp.bfloat16), params["w2_hwio"],
                                 params["shift2_vec"])
    y2 = y2.reshape(N, D, H, W, out_size)
    return jnp.transpose(y2, (0, 4, 2, 3, 1)).astype(jnp.float32)


if __name__ == "__main__":
    key = jax.random.PRNGKey(0)
    k_in1, k_in2, k_params = jax.random.split(key, 3)

    # UnetUp3_SqEx(in_size=8, out_size=4, is_deconv=False, is_batchnorm=True)
    N, in_size, out_size, H, W, D = 2, 8, 4, 16, 16, 4
    inputs1 = jax.random.normal(k_in1, (N, out_size, H, W, D), jnp.float32)
    inputs2 = jax.random.normal(k_in2, (N, in_size, H // 2, W // 2, D), jnp.float32)
    params = build_params(k_params, in_size, out_size)

    # Pin pltpu.roll's rotation direction on this backend before tracing the forward.
    _probe_roll_convention()

    fwd = jax.jit(unet_up3_sqex_forward)
    out = jax.block_until_ready(fwd(inputs1, inputs2, params))
    assert out.shape == (N, out_size, H, W, D), out.shape
    assert bool(jnp.all(jnp.isfinite(out)))

    ref = jax.block_until_ready(jax.jit(unet_up3_sqex_reference)(inputs1, inputs2, params))
    max_err = float(jnp.max(jnp.abs(out - ref)))
    assert bool(jnp.allclose(out, ref, atol=3e-2, rtol=3e-2)), (
        "mismatch vs reference: max abs err %e" % max_err)

    print("KERNEL_OK")
</pallas_src>

<mosaic_0001>
module attributes {stable_mosaic.version = 11 : i64} {
  func.func @probe_kernel(%arg0: memref<8x128xf32, #tpu.memory_space<vmem>>, %arg1: memref<8x128xf32, #tpu.memory_space<vmem>>) attributes {dimension_semantics = [], scalar_prefetch = 0 : i64, scratch_operands = 0 : i64, tpu.core_type = #tpu.core_type<tc>} {
    %c0 = arith.constant 0 : index
    %c0_0 = arith.constant 0 : index
    %0 = vector.load %arg0[%c0, %c0_0] : memref<8x128xf32, #tpu.memory_space<vmem>>, vector<8x128xf32>
    %c1_i32 = arith.constant 1 : i32
    %1 = tpu.dynamic_rotate %0 by %c1_i32 dim 0 : vector<8x128xf32>, i32 -> vector<8x128xf32>
    %c0_1 = arith.constant 0 : index
    %c0_2 = arith.constant 0 : index
    %2 = vector.load %arg1[%c0_1, %c0_2] : memref<8x128xf32, #tpu.memory_space<vmem>>, vector<8x128xf32>
    tpu.vector_store %arg1[%c0_1, %c0_2], %1 {strides = array<i32>} : memref<8x128xf32, #tpu.memory_space<vmem>>, vector<8x128xf32>,
    return
  }
}

</mosaic_0001>

<llo_original>
// kernel: tpu_custom_call.1
$region0: #{tpu_custom_call.1}
  #allocation0 [shape = 'u32[]', space=smem, size = 0x4, offset = 0x4, fixed_abs, tag = 'smem constant byte address 0x4 - core index']
  #allocation1 [shape = 'u32[144,128]{1,0:T(1,128)}', space=vmem, size = 0x12000, scoped, tag = 'internal scratch']
  %s0 = inlined_call_operand.hbm [shape: f32[8,128], index: 0, kind: input, shape index: {}]
  %s1 = inlined_call_operand.hbm [shape: f32[8,128], index: 1, kind: output, shape index: {}]
  %s2 = sld [smem:[#allocation0]]
  $region18: #{tpu_custom_call.1} parent=0
    _
  %s4 = ssub.s32 1, %s2
  %s5 = scalar_select 0, %s4, %s2
  $region1: #{tpu_custom_call.1} parent=0
    #allocation2 [shape = 'u8[4096]{0}', space=vmem, size = 0x1000, scoped, tag = 'input window, operand 0, single buffered']
    #allocation3 [shape = 's32[1]{0}', space=sflag, size = 0x4, scoped, tag = 'scoped memory for tpu_custom_call.1']
    #allocation4 [shape = 's32[1]{0}', space=sflag, size = 0x4, scoped, tag = 'scoped memory for tpu_custom_call.1']
    #allocation5 [shape = 'u8[4096]{0}', space=vmem, size = 0x1000, scoped, tag = 'output window, operand 0, single buffered']
    %6 = vsyncpa [#allocation3], 0
    %7 = vsyncpa [#allocation4], 0
    // Predicated region
    $region2: #{tpu_custom_call.1} parent=1 // pred_check
      _
    $region3: #{tpu_custom_call.1} parent=1 // pred_check_branch
      %9 = sbr.rel (0) target = $region5
    $region4: #{tpu_custom_call.1} parent=1 // pred_region
      %s11 = ssub.s32 128, 128
      %12 = vsyncadd [#allocation3], %s11
      %s14 = sshll.u32 [#allocation2], 4
      %s15 = int_to_ptr.vmem [resolvable:$true] %s14
      %17 = dma.hbm_to_vmem [thread:$0]  %s0, 128, %s15, [#allocation3]
    $region5: #{tpu_custom_call.1} parent=1 // pred_fallthru
      _
    // Predicated region
    $region6: #{tpu_custom_call.1} parent=1 // pred_check
      _
    $region7: #{tpu_custom_call.1} parent=1 // pred_check_branch
      %19 = sbr.rel (0) target = $region9
    $region8: #{tpu_custom_call.1} parent=1 // pred_region
      %20 = dma.done [#allocation3], 128
    $region9: #{tpu_custom_call.1} parent=1 // pred_fallthru
      _
    %v21 = vld [vmem:[#allocation2] sm:$0xff]
    %v22 = vrot.slane %v21, 7
    %23 = vst [vmem:[#allocation5] sm:$0xff] %v22
    // Predicated region
    $region10: #{tpu_custom_call.1} parent=1 // pred_check
      _
    $region11: #{tpu_custom_call.1} parent=1 // pred_check_branch
      %25 = sbr.rel (0) target = $region13
    $region12: #{tpu_custom_call.1} parent=1 // pred_region
      %s27 = ssub.s32 128, 128
      %28 = vsyncadd [#allocation4], %s27
      %s30 = sshll.u32 [#allocation5], 4
      %s31 = int_to_ptr.vmem [resolvable:$true] %s30
      %33 = dma.vmem_to_hbm [thread:$0]  %s31, 128, %s1, [#allocation4]
    $region13: #{tpu_custom_call.1} parent=1 // pred_fallthru
      _
    // Predicated region
    $region14: #{tpu_custom_call.1} parent=1 // pred_check
      _
    $region15: #{tpu_custom_call.1} parent=1 // pred_check_branch
      %35 = sbr.rel (0) target = $region17
    $region16: #{tpu_custom_call.1} parent=1 // pred_region
      %36 = dma.done [#allocation4], 128
    $region17: #{tpu_custom_call.1} parent=1 // pred_fallthru
      _
    %37 = vsyncpa [#allocation3], 1
    %38 = vsyncpa [#allocation4], 1

</llo_original>
